<compile_context>
chip_gen: v7x
topology: tpu7x:2x2x1
jax: 0.10.0
libtpu: 0.0.40
codegen_flags: <defaults>
</compile_context>

<pallas_src>
import jax
import jax.numpy as jnp
from jax import lax
from jax.experimental import pallas as pl
from jax.experimental.pallas import tpu as pltpu

# ---- small, module-consistent hyper-parameters -----------------------------
B = 2                      # batch
N_CHAN = 8                 # nChan  (EEG channels)
N_TIME = 64                # nTime  (divisible by strideFactor)
N_BANDS = 4                # nBands (filter bands)
M = 8                      # m      (spatial filters per band)
STRIDE_FACTOR = 4
N_CLASS = 5
T_SEG = N_TIME // STRIDE_FACTOR          # 16
N_OUT = N_BANDS * M                      # 32 conv output channels
N_IN = N_BANDS * N_CHAN                  # 32 flattened conv input channels
N_COLS = B * N_TIME                      # 128 lane-dense (b, t) columns
N_SEG = STRIDE_FACTOR * B                # 8 (s, b) segments, q = s*B + b
F_FEAT = STRIDE_FACTOR * N_BANDS * M     # 128 flattened feature size
BN_EPS = 1e-5

# column layout inside the packed parameter slab (rows x 128 lanes, f32)
_C_WCONV = 0                 # cols [0, 32)   : block-diag BN-folded conv weight
_C_WCLS = N_IN               # cols [32, 64)  : classifier weight, row = s*8 + k
_C_BCONV = 2 * N_IN          # col 64         : BN-folded conv bias
_C_BCLS = 2 * N_IN + 1       # col 65         : classifier bias (rows 0:5)
_R_SEG = N_OUT               # rows [32, 40)  : segment selector (8, 128)
_P_ROWS = N_OUT + N_SEG      # 40


# ---------------------------------------------------------------------------
# Single fused kernel: SCB conv (+folded BN) + swish + log-variance + Linear
# + LogSoftmax.  Everything lane-dense; two input DMAs, one tiny output.
# ---------------------------------------------------------------------------
def fbcnet_kernel(x_ref, p_ref, o_ref):
    # x_ref : (32, 128)  rows = band*nChan + ch,  cols = b*nTime + t
    # p_ref : (40, 128)  packed weights/biases/segment selector (see layout above)
    # o_ref : (5, 2)     log-softmax output, transposed (class, batch)
    x = x_ref[...]                                           # (32, 128)

    w_conv = p_ref[0:N_OUT, _C_WCONV:_C_WCONV + N_IN]        # (32, 32)
    w_cls = p_ref[0:N_OUT, _C_WCLS:_C_WCLS + N_OUT]          # (32, 32)
    b_conv = p_ref[0:N_OUT, _C_BCONV:_C_BCONV + 1]           # (32, 1)
    b_cls = p_ref[0:N_CLASS, _C_BCLS:_C_BCLS + 1]            # (5, 1)
    seg_sel = p_ref[_R_SEG:_R_SEG + N_SEG, :]                # (8, 128) one-hot

    # grouped spatial conv + folded BatchNorm as ONE lane-dense MXU matmul
    z = jnp.dot(w_conv, x, preferred_element_type=jnp.float32) + b_conv
    # swish
    z = z * jax.nn.sigmoid(z)                                # (32, 128)

    # LogVarLayer: one-pass unbiased variance with a single MXU pass.
    # Per-channel centering (variance is shift invariant) kills cancellation.
    zc = z - jnp.mean(z, axis=1, keepdims=True)              # (32, 128)
    zcat = jnp.concatenate([zc, zc * zc], axis=0)            # (64, 128)
    # contract the lane (time) axis against the one-hot segment selector
    s12 = lax.dot_general(zcat, seg_sel, (((1,), (1,)), ((), ())),
                          preferred_element_type=jnp.float32)  # (64, 8)
    s1 = s12[0:N_OUT, :]                                     # segment sums
    s2 = s12[N_OUT:2 * N_OUT, :]                             # segment sums of squares
    var = (s2 - s1 * s1 * (1.0 / T_SEG)) * (1.0 / (T_SEG - 1))
    lv = jnp.log(jnp.clip(var, 1e-6, 1e6))                   # (32, 8), cols q = s*B + b

    # constrained Linear fused as ONE MXU matmul:
    #   p_all[s*8 + k, q] = sum_c W_lin[k, c*4 + s] * lv[c, q]
    # then logits^T[k, b] = sum_s p_all[s*8 + k, s*B + b]  (4 static sub-blocks)
    p_all = jnp.dot(w_cls, lv, preferred_element_type=jnp.float32)   # (32, 8)
    acc = (p_all[0:8, 0:2] + p_all[8:16, 2:4]
           + p_all[16:24, 4:6] + p_all[24:32, 6:8])          # (8, 2)
    logits_t = acc[0:N_CLASS, :] + b_cls                     # (5, 2) = (class, batch)

    # LogSoftmax over classes (axis 0)
    mx = jnp.max(logits_t, axis=0, keepdims=True)
    sh = logits_t - mx
    lse = jnp.log(jnp.sum(jnp.exp(sh), axis=0, keepdims=True))
    o_ref[...] = sh - lse


# ---------------------------------------------------------------------------
# Host-side wrapper (layout plumbing only)
# ---------------------------------------------------------------------------
def fbcnet_forward(x, params_slab):
    # x: (B, nChan, nTime, nBands) -> lane-dense (nBands*nChan, B*nTime) slab
    x_slab = jnp.transpose(x, (3, 1, 0, 2)).reshape(N_IN, N_COLS)

    out_t = pl.pallas_call(
        fbcnet_kernel,
        out_shape=jax.ShapeDtypeStruct((N_CLASS, B), jnp.float32),
        in_specs=[pl.BlockSpec(memory_space=pltpu.MemorySpace.VMEM)] * 2,
        out_specs=pl.BlockSpec(memory_space=pltpu.MemorySpace.VMEM),
    )(x_slab, params_slab)
    return out_t.T                                            # (B, nClass)


# ---------------------------------------------------------------------------
# Deterministic parameter construction (renorm + BN folding + packing)
# ---------------------------------------------------------------------------
def renorm_rows(w, maxnorm):
    # torch.renorm(w, p=2, dim=0, maxnorm): each dim-0 slice rescaled so its
    # L2 norm is at most maxnorm.
    flat = w.reshape(w.shape[0], -1)
    norms = jnp.sqrt(jnp.sum(flat * flat, axis=1, keepdims=True))
    scale = jnp.where(norms > maxnorm, maxnorm / (norms + 1e-7), 1.0)
    return (flat * scale).reshape(w.shape)


def make_params(key):
    ks = jax.random.split(key, 8)
    w_conv = jax.random.normal(ks[0], (N_OUT, N_CHAN), jnp.float32) * 0.3
    b_conv = jax.random.normal(ks[1], (N_OUT,), jnp.float32) * 0.1
    gamma = 1.0 + 0.1 * jax.random.normal(ks[2], (N_OUT,), jnp.float32)
    beta = 0.1 * jax.random.normal(ks[3], (N_OUT,), jnp.float32)
    rmean = 0.1 * jax.random.normal(ks[4], (N_OUT,), jnp.float32)
    rvar = 1.0 + 0.5 * jax.random.uniform(ks[5], (N_OUT,), jnp.float32)
    w_lin = jax.random.normal(ks[6], (N_CLASS, F_FEAT), jnp.float32) * 0.1
    b_lin = jax.random.normal(ks[7], (N_CLASS,), jnp.float32) * 0.1

    # max-norm constraints (max_norm=2), as Conv2dWithConstraint / LinearWithConstraint
    w_conv = renorm_rows(w_conv, 2.0)
    w_lin = renorm_rows(w_lin, 2.0)

    # fold eval-mode BatchNorm2d into the conv weight & bias
    bn_scale = gamma / jnp.sqrt(rvar + BN_EPS)                      # (32,)
    w_eff = w_conv * bn_scale[:, None]                              # (32, 8)
    b_eff = (b_conv - rmean) * bn_scale + beta                      # (32,)

    # block-diagonal grouped-conv weight, (out_ch, band*nChan) orientation
    w_blocks = w_eff.reshape(N_BANDS, M, N_CHAN)                    # [g, m, ch]
    w_bd = jnp.einsum('gmc,gh->gmhc', w_blocks,
                      jnp.eye(N_BANDS, dtype=jnp.float32))
    w_bd = w_bd.reshape(N_OUT, N_IN)                                # [g*m+j, band*nChan+ch]

    # classifier weight reordered for the fused matmul:
    #   w_cls[s*8 + k, c] = W_lin[k, c*strideFactor + s]   (rows k>=5 zero-padded)
    w_lin_r = w_lin.reshape(N_CLASS, N_OUT, STRIDE_FACTOR)          # [k, c, s]
    w_cls = jnp.transpose(w_lin_r, (2, 0, 1))                       # [s, k, c]
    w_cls = jnp.pad(w_cls, ((0, 0), (0, 8 - N_CLASS), (0, 0)))      # [s, 8, c]
    w_cls = w_cls.reshape(STRIDE_FACTOR * 8, N_OUT)                 # (32, 32)

    # one-hot segment selector (hoisted out of the kernel):
    #   column index col = b*nTime + s*T_SEG + t  ->  segment q = s*B + b
    col = jnp.arange(N_COLS)
    seg_of_col = ((col // T_SEG) % STRIDE_FACTOR) * B + (col // N_TIME)
    seg_sel = (jnp.arange(N_SEG)[:, None] == seg_of_col[None, :]
               ).astype(jnp.float32)                                # (8, 128)

    # pack everything into a single (40, 128) slab -> one parameter DMA
    P = jnp.zeros((_P_ROWS, N_COLS), jnp.float32)
    P = P.at[0:N_OUT, _C_WCONV:_C_WCONV + N_IN].set(w_bd)
    P = P.at[0:N_OUT, _C_WCLS:_C_WCLS + N_OUT].set(w_cls)
    P = P.at[0:N_OUT, _C_BCONV].set(b_eff)
    P = P.at[0:N_CLASS, _C_BCLS].set(b_lin)
    P = P.at[_R_SEG:_R_SEG + N_SEG, :].set(seg_sel)

    torch_like = (w_conv, b_conv, gamma, beta, rmean, rvar, w_lin, b_lin)
    return P, torch_like


# ---------------------------------------------------------------------------
# Pure-JAX reference (identical math, follows PyTorch op order) for validation
# ---------------------------------------------------------------------------
def fbcnet_reference(x, torch_like):
    (w_conv, b_conv, gamma, beta, rmean, rvar, w_lin, b_lin) = torch_like
    xp = jnp.transpose(x, (0, 3, 1, 2))                          # (B, G, C, T)
    wg = w_conv.reshape(N_BANDS, M, N_CHAN)
    z = jnp.einsum('gmc,bgct->bgmt', wg, xp)                     # grouped conv
    z = z + b_conv.reshape(1, N_BANDS, M, 1)
    z = ((z - rmean.reshape(1, N_BANDS, M, 1))
         / jnp.sqrt(rvar.reshape(1, N_BANDS, M, 1) + BN_EPS)
         * gamma.reshape(1, N_BANDS, M, 1) + beta.reshape(1, N_BANDS, M, 1))
    z = z * jax.nn.sigmoid(z)                                    # swish
    z = z.reshape(B, N_BANDS * M, STRIDE_FACTOR, T_SEG)
    v = jnp.var(z, axis=3, ddof=1, keepdims=True)
    lv = jnp.log(jnp.clip(v, 1e-6, 1e6))
    f = lv.reshape(B, F_FEAT)
    logits = f @ w_lin.T + b_lin
    return jax.nn.log_softmax(logits, axis=1)


if __name__ == "__main__":
    key = jax.random.PRNGKey(0)
    kx, kp = jax.random.split(key)
    # PyTorch FBCNet input layout: (B, nChan, nTime, nBands)
    x = jax.random.normal(kx, (B, N_CHAN, N_TIME, N_BANDS), jnp.float32)

    params_slab, torch_like = make_params(kp)

    out = jax.jit(fbcnet_forward)(x, params_slab)
    out = jax.block_until_ready(out)

    ref = fbcnet_reference(x, torch_like)
    assert out.shape == (B, N_CLASS)
    assert jnp.allclose(out, ref, atol=2e-4, rtol=2e-4), (out, ref)

    print("KERNEL_OK")
</pallas_src>

<mosaic_0001>
module attributes {stable_mosaic.version = 11 : i64} {
  func.func @fbcnet_kernel(%arg0: memref<32x128xf32, #tpu.memory_space<vmem>>, %arg1: memref<40x128xf32, #tpu.memory_space<vmem>>, %arg2: memref<5x2xf32, #tpu.memory_space<vmem>>) attributes {dimension_semantics = [], scalar_prefetch = 0 : i64, scratch_operands = 0 : i64, tpu.core_type = #tpu.core_type<tc>} {
    %c0 = arith.constant 0 : index
    %c0_0 = arith.constant 0 : index
    %0 = vector.load %arg0[%c0, %c0_0] : memref<32x128xf32, #tpu.memory_space<vmem>>, vector<32x128xf32>
    %c0_1 = arith.constant 0 : index
    %c0_2 = arith.constant 0 : index
    %1 = vector.load %arg1[%c0_1, %c0_2] : memref<40x128xf32, #tpu.memory_space<vmem>>, vector<32x32xf32>
    %c0_3 = arith.constant 0 : index
    %c32 = arith.constant 32 : index
    %2 = vector.load %arg1[%c0_3, %c32] : memref<40x128xf32, #tpu.memory_space<vmem>>, vector<32x32xf32>
    %c0_4 = arith.constant 0 : index
    %c64 = arith.constant 64 : index
    %3 = vector.load %arg1[%c0_4, %c64] : memref<40x128xf32, #tpu.memory_space<vmem>>, vector<32x1xf32>
    %c0_5 = arith.constant 0 : index
    %c65 = arith.constant 65 : index
    %4 = vector.load %arg1[%c0_5, %c65] : memref<40x128xf32, #tpu.memory_space<vmem>>, vector<5x1xf32>
    %c32_6 = arith.constant 32 : index
    %c0_7 = arith.constant 0 : index
    %5 = vector.load %arg1[%c32_6, %c0_7] : memref<40x128xf32, #tpu.memory_space<vmem>>, vector<8x128xf32>
    %cst = arith.constant dense<0.000000e+00> : vector<32x128xf32>
    %6 = tpu.matmul %1, %0, %cst {dimension_numbers = #tpu.dot_dimension_numbers<[1], [0], [0], [1], [0, 0, 1, 1], [], []>} : vector<32x32xf32>, vector<32x128xf32>, vector<32x128xf32> -> vector<32x128xf32>
    %7 = vector.broadcast %3 : vector<32x1xf32> to vector<32x128xf32>
    %8 = arith.addf %6, %7 : vector<32x128xf32>
    %9 = arith.negf %8 : vector<32x128xf32>
    %10 = math.exp %9 : vector<32x128xf32>
    %cst_8 = arith.constant 1.000000e+00 : f32
    %11 = vector.broadcast %cst_8 : f32 to vector<32x128xf32>
    %12 = arith.addf %11, %10 : vector<32x128xf32>
    %13 = arith.divf %11, %12 : vector<32x128xf32>
    %14 = arith.mulf %8, %13 : vector<32x128xf32>
    %cst_9 = arith.constant dense<0.000000e+00> : vector<32xf32>
    %15 = vector.multi_reduction <add>, %14, %cst_9 [1] : vector<32x128xf32> to vector<32xf32>
    %16 = vector.shape_cast %15 : vector<32xf32> to vector<32x1xf32>
    %cst_10 = arith.constant 1.280000e+02 : f32
    %17 = vector.broadcast %cst_10 : f32 to vector<32x1xf32>
    %18 = arith.divf %16, %17 : vector<32x1xf32>
    %19 = vector.broadcast %18 : vector<32x1xf32> to vector<32x128xf32>
    %20 = arith.subf %14, %19 : vector<32x128xf32>
    %21 = arith.mulf %20, %20 : vector<32x128xf32>
    %22 = tpu.concatenate %20, %21 in 0 : vector<32x128xf32>, vector<32x128xf32> -> vector<64x128xf32>
    %cst_11 = arith.constant dense<0.000000e+00> : vector<64x8xf32>
    %23 = tpu.matmul %22, %5, %cst_11 {dimension_numbers = #tpu.dot_dimension_numbers<[1], [1], [0], [0], [0, 0, 1, 0], [], []>} : vector<64x128xf32>, vector<8x128xf32>, vector<64x8xf32> -> vector<64x8xf32>
    %24 = vector.extract_strided_slice %23 {offsets = [0, 0], sizes = [32, 8], strides = [1, 1]} : vector<64x8xf32> to vector<32x8xf32>
    %25 = vector.extract_strided_slice %23 {offsets = [32, 0], sizes = [32, 8], strides = [1, 1]} : vector<64x8xf32> to vector<32x8xf32>
    %26 = arith.mulf %24, %24 : vector<32x8xf32>
    %cst_12 = arith.constant 6.250000e-02 : f32
    %27 = vector.broadcast %cst_12 : f32 to vector<32x8xf32>
    %28 = arith.mulf %26, %27 : vector<32x8xf32>
    %29 = arith.subf %25, %28 : vector<32x8xf32>
    %cst_13 = arith.constant 0.0666666701 : f32
    %30 = vector.broadcast %cst_13 : f32 to vector<32x8xf32>
    %31 = arith.mulf %29, %30 : vector<32x8xf32>
    %cst_14 = arith.constant 9.99999997E-7 : f32
    %cst_15 = arith.constant 1.000000e+06 : f32
    %32 = vector.broadcast %cst_14 : f32 to vector<32x8xf32>
    %33 = arith.maximumf %32, %31 : vector<32x8xf32>
    %34 = vector.broadcast %cst_15 : f32 to vector<32x8xf32>
    %35 = arith.minimumf %34, %33 : vector<32x8xf32>
    %36 = math.log %35 : vector<32x8xf32>
    %cst_16 = arith.constant dense<0.000000e+00> : vector<32x8xf32>
    %37 = tpu.matmul %2, %36, %cst_16 {dimension_numbers = #tpu.dot_dimension_numbers<[1], [0], [0], [1], [0, 0, 1, 1], [], []>} : vector<32x32xf32>, vector<32x8xf32>, vector<32x8xf32> -> vector<32x8xf32>
    %38 = vector.extract_strided_slice %37 {offsets = [0, 0], sizes = [8, 2], strides = [1, 1]} : vector<32x8xf32> to vector<8x2xf32>
    %39 = vector.extract_strided_slice %37 {offsets = [8, 2], sizes = [8, 2], strides = [1, 1]} : vector<32x8xf32> to vector<8x2xf32>
    %40 = arith.addf %38, %39 : vector<8x2xf32>
    %41 = vector.extract_strided_slice %37 {offsets = [16, 4], sizes = [8, 2], strides = [1, 1]} : vector<32x8xf32> to vector<8x2xf32>
    %42 = arith.addf %40, %41 : vector<8x2xf32>
    %43 = vector.extract_strided_slice %37 {offsets = [24, 6], sizes = [8, 2], strides = [1, 1]} : vector<32x8xf32> to vector<8x2xf32>
    %44 = arith.addf %42, %43 : vector<8x2xf32>
    %45 = vector.extract_strided_slice %44 {offsets = [0, 0], sizes = [5, 2], strides = [1, 1]} : vector<8x2xf32> to vector<5x2xf32>
    %46 = vector.broadcast %4 : vector<5x1xf32> to vector<5x2xf32>
    %47 = arith.addf %45, %46 : vector<5x2xf32>
    %cst_17 = arith.constant dense<0xFF800000> : vector<2xf32>
    %48 = vector.multi_reduction <maximumf>, %47, %cst_17 [0] : vector<5x2xf32> to vector<2xf32>
    %49 = vector.shape_cast %48 : vector<2xf32> to vector<1x2xf32>
    %50 = vector.broadcast %49 : vector<1x2xf32> to vector<5x2xf32>
    %51 = arith.subf %47, %50 : vector<5x2xf32>
    %52 = math.exp %51 : vector<5x2xf32>
    %cst_18 = arith.constant dense<0.000000e+00> : vector<2xf32>
    %53 = vector.multi_reduction <add>, %52, %cst_18 [0] : vector<5x2xf32> to vector<2xf32>
    %54 = vector.shape_cast %53 : vector<2xf32> to vector<1x2xf32>
    %55 = math.log %54 : vector<1x2xf32>
    %56 = vector.broadcast %55 : vector<1x2xf32> to vector<5x2xf32>
    %57 = arith.subf %51, %56 : vector<5x2xf32>
    %c0_19 = arith.constant 0 : index
    %c0_20 = arith.constant 0 : index
    %58 = vector.load %arg2[%c0_19, %c0_20] : memref<5x2xf32, #tpu.memory_space<vmem>>, vector<5x2xf32>
    tpu.vector_store %arg2[%c0_19, %c0_20], %57 {strides = array<i32>} : memref<5x2xf32, #tpu.memory_space<vmem>>, vector<5x2xf32>,
    return
  }
}

</mosaic_0001>

<llo_original>
// kernel: fbcnet_forward.1
$region0: #{fbcnet_forward.1}
  #allocation0 [shape = 'u32[]', space=smem, size = 0x4, offset = 0x4, fixed_abs, tag = 'smem constant byte address 0x4 - core index']
  #allocation1 [shape = 'u32[144,128]{1,0:T(1,128)}', space=vmem, size = 0x12000, scoped, tag = 'internal scratch']
  %s0 = inlined_call_operand.vmem [shape: f32[32,128], index: 0, kind: input, shape index: {}]
  %s1 = inlined_call_operand.vmem [shape: f32[40,128], index: 1, kind: input, shape index: {}]
  %s2 = inlined_call_operand.vmem [shape: f32[5,2], index: 2, kind: output, shape index: {}]
  %s3 = sld [smem:[#allocation0]]
  $region18: #{fbcnet_forward.1} parent=0
    _
  %s5 = ssub.s32 1, %s3
  %s6 = scalar_select 0, %s5, %s3
  // Predicated region
  $region2: #{fbcnet_forward.1} parent=0 // pred_check
    _
  $region3: #{fbcnet_forward.1} parent=0 // pred_check_branch
    %8 = sbr.rel (0) target = $region5
  $region4: #{fbcnet_forward.1} parent=0 // pred_region
    _
  $region5: #{fbcnet_forward.1} parent=0 // pred_fallthru
    _
  // Predicated region
  $region6: #{fbcnet_forward.1} parent=0 // pred_check
    _
  $region7: #{fbcnet_forward.1} parent=0 // pred_check_branch
    %10 = sbr.rel (0) target = $region9
  $region8: #{fbcnet_forward.1} parent=0 // pred_region
    _
  $region9: #{fbcnet_forward.1} parent=0 // pred_fallthru
    _
  %v11 = vld [vmem:[%s0] sm:$0xff]
  %v12 = vld [vmem:[%s0 + $0x8] sm:$0xff]
  %v13 = vld [vmem:[%s0 + $0x10] sm:$0xff]
  %v14 = vld [vmem:[%s0 + $0x18] sm:$0xff]
  %v15 = vld [vmem:[%s1] sm:$0xff]
  %v16 = vld [vmem:[%s1 + $0x8] sm:$0xff]
  %v17 = vld [vmem:[%s1 + $0x10] sm:$0xff]
  %v18 = vld [vmem:[%s1 + $0x18] sm:$0xff]
  %v19 = vld [vmem:[%s1] sm:$0x1f]
  %v20 = vld [vmem:[%s1 + $0x20] sm:$0xff]
  %22 = vset.pattern.permute.xlu0 64
  %23 = vperm.xlu0 %22, %v15
  %v24 = vpop.permute.xlu0 %23
  %27 = vset.pattern.permute.xlu0 64
  %28 = vperm.xlu0 %27, %v16
  %v29 = vpop.permute.xlu0 %28
  %32 = vset.pattern.permute.xlu0 64
  %33 = vperm.xlu0 %32, %v17
  %v34 = vpop.permute.xlu0 %33
  %37 = vset.pattern.permute.xlu0 64
  %38 = vperm.xlu0 %37, %v18
  %v39 = vpop.permute.xlu0 %38
  %vm41 = vcmask 261120
  %v42 = vsel %vm41, %v15, 0
  %v44 = vsel %vm41, %v16, 0
  %v46 = vsel %vm41, %v17, 0
  %v48 = vsel %vm41, %v18, 0
  %50 = vmatprep.subr.mxu0 0.0
  %51 = vmatpush1.msra.mxu0 %v11
  %52 = vmatprep.subr.mxu0 0.0
  %53 = vmatpush1.msra.mxu0 %v12
  %54 = vmatprep.subr.mxu0 0.0
  %55 = vmatpush1.msra.mxu0 %v13
  %56 = vmatprep.subr.mxu0 0.0
  %57 = vmatpush1.msra.mxu0 %v14
  %58 = vmatprep.subr.mxu0 0.0
  %59 = vmatpush1.msra.mxu0 0.0
  %60 = vmatprep.subr.mxu0 0.0
  %61 = vmatpush1.msra.mxu0 0.0
  %62 = vmatprep.subr.mxu0 0.0
  %63 = vmatpush1.msra.mxu0 0.0
  %64 = vmatprep.subr.mxu0 0.0
  %65 = vmatpush1.msra.mxu0 0.0
  %66 = vmatprep.subr.mxu0 0.0
  %67 = vmatpush1.msra.mxu0 0.0
  %68 = vmatprep.subr.mxu0 0.0
  %69 = vmatpush1.msra.mxu0 0.0
  %70 = vmatprep.subr.mxu0 0.0
  %71 = vmatpush1.msra.mxu0 0.0
  %72 = vmatprep.subr.mxu0 0.0
  %73 = vmatpush1.msra.mxu0 0.0
  %74 = vmatprep.subr.mxu0 0.0
  %75 = vmatpush1.msra.mxu0 0.0
  %76 = vmatprep.subr.mxu0 0.0
  %77 = vmatpush1.msra.mxu0 0.0
  %78 = vmatprep.subr.mxu0 0.0
  %79 = vmatpush1.msra.mxu0 0.0
  %80 = vmatprep.subr.mxu0 0.0
  %81 = vmatpush1.msra.mxu0 0.0
  %82 = vmatprep.subr.mxu0 0.0
  %83 = vmatpush1.msra.mxu0 0.0
  %84 = vmatprep.subr.mxu0 0.0
  %85 = vmatpush1.msra.mxu0 0.0
  %86 = vmatprep.subr.mxu0 0.0
  %87 = vmatpush1.msra.mxu0 0.0
  %88 = vmatprep.subr.mxu0 0.0
  %89 = vmatpush1.msra.mxu0 0.0
  %90 = vmatprep.subr.mxu0 0.0
  %91 = vmatpush1.msra.mxu0 0.0
  %92 = vmatprep.subr.mxu0 0.0
  %93 = vmatpush1.msra.mxu0 0.0
  %94 = vmatprep.subr.mxu0 0.0
  %95 = vmatpush1.msra.mxu0 0.0
  %96 = vmatprep.subr.mxu0 0.0
  %97 = vmatpush1.msra.mxu0 0.0
  %98 = vmatprep.subr.mxu0 0.0
  %99 = vmatpush1.msra.mxu0 0.0
  %100 = vmatprep.subr.mxu0 0.0
  %101 = vmatpush1.msra.mxu0 0.0
  %102 = vmatprep.subr.mxu0 0.0
  %103 = vmatpush1.msra.mxu0 0.0
  %104 = vmatprep.subr.mxu0 0.0
  %105 = vmatpush1.msra.mxu0 0.0
  %106 = vmatprep.subr.mxu0 0.0
  %107 = vmatpush1.msra.mxu0 0.0
  %108 = vmatprep.subr.mxu0 0.0
  %109 = vmatpush1.msra.mxu0 0.0
  %110 = vmatprep.subr.mxu0 0.0
  %111 = vmatpush1.msra.mxu0 0.0
  %112 = vmatprep.subr.mxu0 0.0
  %113 = vmatpush1.msra.mxu0 0.0
  %114 = vmatprep.mubr.f32.mxu0 0.0
  %115 = vmatmul.mubr.f32.gmra.mrb[0].mxu0 %v42
  %v116 = vpop.f32.mrb[0].mxu0
  %v117 = vadd.f32 %v24, %v116
  %v118 = vpop.f32.mrb[0].mxu0
  %119 = vmatprep.mubr.f32.mxu0 0.0
  %120 = vmatmul.mubr.f32.gmra.mrb[0].mxu0 %v44
  %v121 = vpop.f32.mrb[0].mxu0
  %v122 = vadd.f32 %v29, %v121
  %v123 = vpop.f32.mrb[0].mxu0
  %124 = vmatprep.mubr.f32.mxu0 0.0
  %125 = vmatmul.mubr.f32.gmra.mrb[0].mxu0 %v46
  %v126 = vpop.f32.mrb[0].mxu0
  %v127 = vadd.f32 %v34, %v126
  %v128 = vpop.f32.mrb[0].mxu0
  %129 = vmatprep.mubr.f32.mxu0 0.0
  %130 = vmatmul.mubr.f32.gmra.mrb[0].mxu0 %v48
  %v131 = vpop.f32.mrb[0].mxu0
  %v132 = vadd.f32 %v39, %v131
  %v133 = vpop.f32.mrb[0].mxu0
  %134 = vdwg.mxu0
  %v135 = vxor.u32 %v117, 2147483648
  %v136 = vxor.u32 %v122, 2147483648
  %v137 = vxor.u32 %v127, 2147483648
  %v138 = vxor.u32 %v132, 2147483648
  %v139 = vmul.f32 %v135, 1.442695
  %v140 = vpow.pop %v139
  %v141 = vmul.f32 %v136, 1.442695
  %v142 = vpow.pop %v141
  %v143 = vmul.f32 %v137, 1.442695
  %v144 = vpow.pop %v143
  %v145 = vmul.f32 %v138, 1.442695
  %v146 = vpow.pop %v145
  %v147 = vadd.f32 %v140, 1.0
  %v148 = vadd.f32 %v142, 1.0
  %v149 = vadd.f32 %v144, 1.0
  %v150 = vadd.f32 %v146, 1.0
  %v151 = vrcp.pop %v147
  %v152 = vmul.f32 1.0, %v151
  %v153 = vrcp.pop %v148
  %v154 = vmul.f32 1.0, %v153
  %v155 = vrcp.pop %v149
  %v156 = vmul.f32 1.0, %v155
  %v157 = vrcp.pop %v150
  %v158 = vmul.f32 1.0, %v157
  %v159 = vmul.f32 %v117, %v152
  %v160 = vmul.f32 %v122, %v154
  %v161 = vmul.f32 %v127, %v156
  %v162 = vmul.f32 %v132, %v158
  %163 = vadd.xlane.f32.xlu0 %v159
  %v164 = vpop.xlane.xlu0 %163
  %165 = vadd.xlane.f32.xlu0 %v160
  %v166 = vpop.xlane.xlu0 %165
  %167 = vadd.xlane.f32.xlu0 %v161
  %v168 = vpop.xlane.xlu0 %167
  %169 = vadd.xlane.f32.xlu0 %v162
  %v170 = vpop.xlane.xlu0 %169
  %v171 = vrcp.pop 128.0
  %v172 = vmul.f32 %v164, %v171
  %v173 = vmul.f32 %v166, %v171
  %v174 = vmul.f32 %v168, %v171
  %v175 = vmul.f32 %v170, %v171
  %v176 = vsub.f32 %v159, %v172
  %v177 = vsub.f32 %v160, %v173
  %v178 = vsub.f32 %v161, %v174
  %v179 = vsub.f32 %v162, %v175
  %v180 = vmul.f32 %v176, %v176
  %v181 = vmul.f32 %v177, %v177
  %v182 = vmul.f32 %v178, %v178
  %v183 = vmul.f32 %v179, %v179
  %184 = vmatprep.subr.mxu0 0.0
  %185 = vmatpush1.xpose.msra.mxu0 %v20
  %186 = vmatprep.subr.mxu0 0.0
  %187 = vmatpush1.xpose.msra.mxu0 0.0
  %188 = vmatprep.subr.mxu0 0.0
  %189 = vmatpush1.xpose.msra.mxu0 0.0
  %190 = vmatprep.subr.mxu0 0.0
  %191 = vmatpush1.xpose.msra.mxu0 0.0
  %192 = vmatprep.subr.mxu0 0.0
  %193 = vmatpush1.xpose.msra.mxu0 0.0
  %194 = vmatprep.subr.mxu0 0.0
  %195 = vmatpush1.xpose.msra.mxu0 0.0
  %196 = vmatprep.subr.mxu0 0.0
  %197 = vmatpush1.xpose.msra.mxu0 0.0
  %198 = vmatprep.subr.mxu0 0.0
  %199 = vmatpush1.xpose.msra.mxu0 0.0
  %200 = vmatprep.subr.mxu0 0.0
  %201 = vmatpush1.xpose.msra.mxu0 0.0
  %202 = vmatprep.subr.mxu0 0.0
  %203 = vmatpush1.xpose.msra.mxu0 0.0
  %204 = vmatprep.subr.mxu0 0.0
  %205 = vmatpush1.xpose.msra.mxu0 0.0
  %206 = vmatprep.subr.mxu0 0.0
  %207 = vmatpush1.xpose.msra.mxu0 0.0
  %208 = vmatprep.subr.mxu0 0.0
  %209 = vmatpush1.xpose.msra.mxu0 0.0
  %210 = vmatprep.subr.mxu0 0.0
  %211 = vmatpush1.xpose.msra.mxu0 0.0
  %212 = vmatprep.subr.mxu0 0.0
  %213 = vmatpush1.xpose.msra.mxu0 0.0
  %214 = vmatprep.subr.mxu0 0.0
  %215 = vmatpush1.xpose.msra.mxu0 0.0
  %216 = vmatprep.subr.mxu0 0.0
  %217 = vmatpush1.xpose.msra.mxu0 0.0
  %218 = vmatprep.subr.mxu0 0.0
  %219 = vmatpush1.xpose.msra.mxu0 0.0
  %220 = vmatprep.subr.mxu0 0.0
  %221 = vmatpush1.xpose.msra.mxu0 0.0
  %222 = vmatprep.subr.mxu0 0.0
  %223 = vmatpush1.xpose.msra.mxu0 0.0
  %224 = vmatprep.subr.mxu0 0.0
  %225 = vmatpush1.xpose.msra.mxu0 0.0
  %226 = vmatprep.subr.mxu0 0.0
  %227 = vmatpush1.xpose.msra.mxu0 0.0
  %228 = vmatprep.subr.mxu0 0.0
  %229 = vmatpush1.xpose.msra.mxu0 0.0
  %230 = vmatprep.subr.mxu0 0.0
  %231 = vmatpush1.xpose.msra.mxu0 0.0
  %232 = vmatprep.subr.mxu0 0.0
  %233 = vmatpush1.xpose.msra.mxu0 0.0
  %234 = vmatprep.subr.mxu0 0.0
  %235 = vmatpush1.xpose.msra.mxu0 0.0
  %236 = vmatprep.subr.mxu0 0.0
  %237 = vmatpush1.xpose.msra.mxu0 0.0
  %238 = vmatprep.subr.mxu0 0.0
  %239 = vmatpush1.xpose.msra.mxu0 0.0
  %240 = vmatprep.subr.mxu0 0.0
  %241 = vmatpush1.xpose.msra.mxu0 0.0
  %242 = vmatprep.subr.mxu0 0.0
  %243 = vmatpush1.xpose.msra.mxu0 0.0
  %244 = vmatprep.subr.mxu0 0.0
  %245 = vmatpush1.xpose.msra.mxu0 0.0
  %246 = vmatprep.subr.mxu0 0.0
  %247 = vmatpush1.xpose.msra.mxu0 0.0
  %248 = vmatprep.mubr.f32.mxu0 0.0
  %249 = vmatmul.mubr.f32.gmra.mrb[0].mxu0 %v176
  %v250 = vpop.f32.mrb[0].mxu0
  %v251 = vadd.f32 0.0, %v250
  %v252 = vpop.f32.mrb[0].mxu0
  %253 = vmatprep.mubr.f32.mxu0 0.0
  %254 = vmatmul.mubr.f32.gmra.mrb[0].mxu0 %v177
  %v255 = vpop.f32.mrb[0].mxu0
  %v256 = vadd.f32 0.0, %v255
  %v257 = vpop.f32.mrb[0].mxu0
  %258 = vmatprep.mubr.f32.mxu0 0.0
  %259 = vmatmul.mubr.f32.gmra.mrb[0].mxu0 %v178
  %v260 = vpop.f32.mrb[0].mxu0
  %v261 = vadd.f32 0.0, %v260
  %v262 = vpop.f32.mrb[0].mxu0
  %263 = vmatprep.mubr.f32.mxu0 0.0
  %264 = vmatmul.mubr.f32.gmra.mrb[0].mxu0 %v179
  %v265 = vpop.f32.mrb[0].mxu0
  %v266 = vadd.f32 0.0, %v265
  %v267 = vpop.f32.mrb[0].mxu0
  %268 = vmatprep.mubr.f32.mxu0 0.0
  %269 = vmatmul.mubr.f32.gmra.mrb[0].mxu0 %v180
  %v270 = vpop.f32.mrb[0].mxu0
  %v271 = vadd.f32 0.0, %v270
  %v272 = vpop.f32.mrb[0].mxu0
  %273 = vmatprep.mubr.f32.mxu0 0.0
  %274 = vmatmul.mubr.f32.gmra.mrb[0].mxu0 %v181
  %v275 = vpop.f32.mrb[0].mxu0
  %v276 = vadd.f32 0.0, %v275
  %v277 = vpop.f32.mrb[0].mxu0
  %278 = vmatprep.mubr.f32.mxu0 0.0
  %279 = vmatmul.mubr.f32.gmra.mrb[0].mxu0 %v182
  %v280 = vpop.f32.mrb[0].mxu0
  %v281 = vadd.f32 0.0, %v280
  %v282 = vpop.f32.mrb[0].mxu0
  %283 = vmatprep.mubr.f32.mxu0 0.0
  %284 = vmatmul.mubr.f32.gmra.mrb[0].mxu0 %v183
  %v285 = vpop.f32.mrb[0].mxu0
  %v286 = vadd.f32 0.0, %v285
  %v287 = vpop.f32.mrb[0].mxu0
  %288 = vdwg.mxu0
  %v289 = vmul.f32 %v251, %v251
  %v290 = vmul.f32 %v256, %v256
  %v291 = vmul.f32 %v261, %v261
  %v292 = vmul.f32 %v266, %v266
  %v293 = vmul.f32 %v289, 0.0625
  %v294 = vmul.f32 %v290, 0.0625
  %v295 = vmul.f32 %v291, 0.0625
  %v296 = vmul.f32 %v292, 0.0625
  %v297 = vsub.f32 %v271, %v293
  %v298 = vsub.f32 %v276, %v294
  %v299 = vsub.f32 %v281, %v295
  %v300 = vsub.f32 %v286, %v296
  %v301 = vmul.f32 %v297, 0.06666667
  %v302 = vmul.f32 %v298, 0.06666667
  %v303 = vmul.f32 %v299, 0.06666667
  %v304 = vmul.f32 %v300, 0.06666667
  %v305 = vmax.f32 %v301, 1e-06
  %v306 = vmax.f32 %v302, 1e-06
  %v307 = vmax.f32 %v303, 1e-06
  %v308 = vmax.f32 %v304, 1e-06
  %v309 = vmin.f32 %v305, 1000000.0
  %v310 = vmin.f32 %v306, 1000000.0
  %v311 = vmin.f32 %v307, 1000000.0
  %v312 = vmin.f32 %v308, 1000000.0
  %v313 = vlog2.pop %v309
  %v314 = vmul.f32 %v313, 0.6931472
  %v315 = vlog2.pop %v310
  %v316 = vmul.f32 %v315, 0.6931472
  %v317 = vlog2.pop %v311
  %v318 = vmul.f32 %v317, 0.6931472
  %v319 = vlog2.pop %v312
  %v320 = vmul.f32 %v319, 0.6931472
  %321 = vrot.lane.b32.xlu0 %v15, 96
  %v322 = vpop.permute.xlu0 %321
  %323 = vrot.lane.b32.xlu0 %v16, 96
  %v324 = vpop.permute.xlu0 %323
  %325 = vrot.lane.b32.xlu0 %v17, 96
  %v326 = vpop.permute.xlu0 %325
  %327 = vrot.lane.b32.xlu0 %v18, 96
  %v328 = vpop.permute.xlu0 %327
  %v329 = vsel %vm41, %v322, 0
  %v331 = vsel %vm41, %v324, 0
  %v333 = vsel %vm41, %v326, 0
  %v335 = vsel %vm41, %v328, 0
  %337 = vmatprep.subr.mxu0 0.0
  %338 = vmatpush1.msra.mxu0 %v314
  %339 = vmatprep.subr.mxu0 0.0
  %340 = vmatpush1.msra.mxu0 %v316
  %341 = vmatprep.subr.mxu0 0.0
  %342 = vmatpush1.msra.mxu0 %v318
  %343 = vmatprep.subr.mxu0 0.0
  %344 = vmatpush1.msra.mxu0 %v320
  %345 = vmatprep.subr.mxu0 0.0
  %346 = vmatpush1.msra.mxu0 0.0
  %347 = vmatprep.subr.mxu0 0.0
  %348 = vmatpush1.msra.mxu0 0.0
  %349 = vmatprep.subr.mxu0 0.0
  %350 = vmatpush1.msra.mxu0 0.0
  %351 = vmatprep.subr.mxu0 0.0
  %352 = vmatpush1.msra.mxu0 0.0
  %353 = vmatprep.subr.mxu0 0.0
  %354 = vmatpush1.msra.mxu0 0.0
  %355 = vmatprep.subr.mxu0 0.0
  %356 = vmatpush1.msra.mxu0 0.0
  %357 = vmatprep.subr.mxu0 0.0
  %358 = vmatpush1.msra.mxu0 0.0
  %359 = vmatprep.subr.mxu0 0.0
  %360 = vmatpush1.msra.mxu0 0.0
  %361 = vmatprep.subr.mxu0 0.0
  %362 = vmatpush1.msra.mxu0 0.0
  %363 = vmatprep.subr.mxu0 0.0
  %364 = vmatpush1.msra.mxu0 0.0
  %365 = vmatprep.subr.mxu0 0.0
  %366 = vmatpush1.msra.mxu0 0.0
  %367 = vmatprep.subr.mxu0 0.0
  %368 = vmatpush1.msra.mxu0 0.0
  %369 = vmatprep.subr.mxu0 0.0
  %370 = vmatpush1.msra.mxu0 0.0
  %371 = vmatprep.subr.mxu0 0.0
  %372 = vmatpush1.msra.mxu0 0.0
  %373 = vmatprep.subr.mxu0 0.0
  %374 = vmatpush1.msra.mxu0 0.0
  %375 = vmatprep.subr.mxu0 0.0
  %376 = vmatpush1.msra.mxu0 0.0
  %377 = vmatprep.subr.mxu0 0.0
  %378 = vmatpush1.msra.mxu0 0.0
  %379 = vmatprep.subr.mxu0 0.0
  %380 = vmatpush1.msra.mxu0 0.0
  %381 = vmatprep.subr.mxu0 0.0
  %382 = vmatpush1.msra.mxu0 0.0
  %383 = vmatprep.subr.mxu0 0.0
  %384 = vmatpush1.msra.mxu0 0.0
  %385 = vmatprep.subr.mxu0 0.0
  %386 = vmatpush1.msra.mxu0 0.0
  %387 = vmatprep.subr.mxu0 0.0
  %388 = vmatpush1.msra.mxu0 0.0
  %389 = vmatprep.subr.mxu0 0.0
  %390 = vmatpush1.msra.mxu0 0.0
  %391 = vmatprep.subr.mxu0 0.0
  %392 = vmatpush1.msra.mxu0 0.0
  %393 = vmatprep.subr.mxu0 0.0
  %394 = vmatpush1.msra.mxu0 0.0
  %395 = vmatprep.subr.mxu0 0.0
  %396 = vmatpush1.msra.mxu0 0.0
  %397 = vmatprep.subr.mxu0 0.0
  %398 = vmatpush1.msra.mxu0 0.0
  %399 = vmatprep.subr.mxu0 0.0
  %400 = vmatpush1.msra.mxu0 0.0
  %401 = vmatprep.mubr.f32.mxu0 0.0
  %402 = vmatmul.mubr.f32.gmra.mrb[0].mxu0 %v329
  %v403 = vpop.f32.mrb[0].mxu0
  %v404 = vadd.f32 0.0, %v403
  %v405 = vpop.f32.mrb[0].mxu0
  %406 = vmatprep.mubr.f32.mxu0 0.0
  %407 = vmatmul.mubr.f32.gmra.mrb[0].mxu0 %v331
  %v408 = vpop.f32.mrb[0].mxu0
  %v409 = vadd.f32 0.0, %v408
  %v410 = vpop.f32.mrb[0].mxu0
  %411 = vmatprep.mubr.f32.mxu0 0.0
  %412 = vmatmul.mubr.f32.gmra.mrb[0].mxu0 %v333
  %v413 = vpop.f32.mrb[0].mxu0
  %v414 = vadd.f32 0.0, %v413
  %v415 = vpop.f32.mrb[0].mxu0
  %416 = vmatprep.mubr.f32.mxu0 0.0
  %417 = vmatmul.mubr.f32.gmra.mrb[0].mxu0 %v335
  %v418 = vpop.f32.mrb[0].mxu0
  %v419 = vadd.f32 0.0, %v418
  %v420 = vpop.f32.mrb[0].mxu0
  %421 = vdwg.mxu0
  %423 = vrot.lane.b32.xlu0 %v409, 126
  %v424 = vpop.permute.xlu0 %423
  %v426 = vadd.f32 %v404, %v424
  %428 = vrot.lane.b32.xlu0 %v414, 124
  %v429 = vpop.permute.xlu0 %428
  %v431 = vadd.f32 %v426, %v429
  %433 = vrot.lane.b32.xlu0 %v419, 122
  %v434 = vpop.permute.xlu0 %433
  %v436 = vadd.f32 %v431, %v434
  %438 = vset.pattern.permute.xlu0 65
  %439 = vperm.xlu0 %438, %v19
  %v440 = vpop.permute.xlu0 %439
  %v442 = vadd.f32 %v436, %v440
  %vm443 = vcmask 12288
  %v444 = vsel %vm443, %v442, -inf
  %v445 = vrot.slane %v444, 4
  %v446 = vmax.f32 %v444, %v445
  %v447 = vrot.slane %v446, 2
  %v448 = vmax.f32 %v446, %v447
  %v449 = vrot.slane %v448, 1
  %v450 = vmax.f32 %v448, %v449
  %v451 = vsub.f32 %v442, %v450
  %v452 = vmul.f32 %v451, 1.442695
  %v453 = vpow.pop %v452
  %v454 = vsel %vm443, %v453, 0.0
  %v455 = vrot.slane %v454, 4
  %v456 = vadd.f32 %v454, %v455
  %v457 = vrot.slane %v456, 2
  %v458 = vadd.f32 %v456, %v457
  %v459 = vrot.slane %v458, 1
  %v460 = vadd.f32 %v458, %v459
  %v461 = vlog2.pop %v460
  %v462 = vmul.f32 %v461, 0.6931472
  %v463 = vsub.f32 %v451, %v462
  %464 = vst.msk [vmem:[%s2] sm:$0x1f] %vm443, %v463
  // Predicated region
  $region10: #{fbcnet_forward.1} parent=0 // pred_check
    _
  $region11: #{fbcnet_forward.1} parent=0 // pred_check_branch
    %466 = sbr.rel (0) target = $region13
  $region12: #{fbcnet_forward.1} parent=0 // pred_region
    _
  $region13: #{fbcnet_forward.1} parent=0 // pred_fallthru
    _
  // Predicated region
  $region14: #{fbcnet_forward.1} parent=0 // pred_check
    _
  $region15: #{fbcnet_forward.1} parent=0 // pred_check_branch
    %468 = sbr.rel (0) target = $region17
  $region16: #{fbcnet_forward.1} parent=0 // pred_region
    _
  $region17: #{fbcnet_forward.1} parent=0 // pred_fallthru
    _

</llo_original>
